<compile_context>
chip_gen: v5e
topology: v5e:2x2
jax: 0.10.0
libtpu: 0.0.40
codegen_flags: <defaults>
</compile_context>

<pallas_src>
import functools

import jax
import jax.numpy as jnp
from jax import lax
from jax.experimental import pallas as pl
from jax.experimental.pallas import tpu as pltpu

LANES = 128
MAX_TM = 4096   # row-tile height: 4096 * 128 * 4B = 2 MiB per input block
SLAB = 128      # rows per in-kernel compute slab (16 f32 vregs per temporary)


def _wmse_kernel(pred_ref, targ_ref, out_ref, *, weights, thresholds,
                 tm, slab, acc_rows, m_rows, n_tiles, n_inner, has_overflow):
    c = pl.program_id(0)            # TensorCore shard ("parallel" axis)
    i = pl.program_id(1)            # reduction step within the shard
    g = c * n_inner + i             # global row-tile index (may overflow by 1)

    @pl.when(i == 0)
    def _():
        out_ref[...] = jnp.zeros_like(out_ref)

    n_slabs = tm // slab
    fold = slab // acc_rows
    last = n_tiles - 1
    tail_rows = m_rows - last * tm          # valid rows in the last tile (static)

    def one_slab(start, valid_rows):
        # The tile is already in VMEM (auto-pipelined); these are vector loads.
        t = targ_ref[pl.ds(start, slab), :].astype(jnp.float32)
        p = pred_ref[pl.ds(start, slab), :].astype(jnp.float32)
        # torch.bucketize(target, thresholds, right=True) -> weights[bin].
        # thresholds are static & ascending: unrolled `>=` select cascade (VPU).
        # TODO(synk): switch to a log-depth select tree if len(thresholds) > ~8.
        w = jnp.full(t.shape, jnp.float32(weights[0]), jnp.float32)
        for j, thr in enumerate(thresholds):
            w = jnp.where(t >= jnp.float32(thr), jnp.float32(weights[j + 1]), w)
        d = p - t
        sq = w * d * d
        if valid_rows is not None:
            # Garbage rows of a partial last tile (could even be NaN/Inf) are
            # discarded via select, never multiplied in.
            row = lax.broadcasted_iota(jnp.int32, sq.shape, 0) + start
            sq = jnp.where(row < valid_rows, sq, 0.0)
        if fold > 1:
            sq = sq.reshape(fold, acc_rows, LANES).sum(axis=0)
        out_ref[...] += sq

    def run_slabs(n_run, valid_rows):
        if n_run == 1:
            one_slab(0, valid_rows)
        else:
            def body(s, carry):
                one_slab(pl.multiple_of(s * slab, slab), valid_rows)
                return carry
            lax.fori_loop(0, n_run, body, 0, unroll=True)

    if tail_rows < tm:                      # the globally-last tile is partial
        @pl.when(g < last)
        def _():
            run_slabs(n_slabs, None)

        @pl.when(g == last)
        def _():
            run_slabs(pl.cdiv(tail_rows, slab), tail_rows)
        # g > last (overflow step on the second shard) contributes nothing.
    elif has_overflow:
        @pl.when(g < n_tiles)
        def _():
            run_slabs(n_slabs, None)
    else:
        run_slabs(n_slabs, None)


def threshold_wmse(prediction, target, weights, thresholds):
    """Pallas implementation of ThresholdWMSE.forward.

    weights / thresholds are static Python sequences (module buffers),
    len(weights) == len(thresholds) + 1.
    """
    assert prediction.shape == target.shape
    weights = tuple(float(w) for w in weights)
    thresholds = tuple(float(t) for t in thresholds)
    assert len(weights) == len(thresholds) + 1

    n_valid = int(prediction.size)
    if n_valid == 0:
        return jnp.float32(jnp.nan)

    # TODO(synk): stream sub-32-bit dtypes natively (needs 16/32-row sublane
    # tiles); for now normalize to f32 so the (8,128) tiling below is valid.
    if prediction.dtype != jnp.float32:
        prediction = prediction.astype(jnp.float32)
    if target.dtype != jnp.float32:
        target = target.astype(jnp.float32)

    pred_flat = prediction.reshape(-1)
    targ_flat = target.reshape(-1)

    m_rows = n_valid // LANES
    tail_n = n_valid - m_rows * LANES

    total = jnp.float32(0.0)

    # <128-element ragged tail: fold with plain XLA ops (no full-array pad).
    if tail_n:
        w_arr = jnp.asarray(weights, jnp.float32)
        thr_arr = jnp.asarray(thresholds, jnp.float32)
        pt = pred_flat[m_rows * LANES:]
        tt = targ_flat[m_rows * LANES:]
        idx = jnp.searchsorted(thr_arr, tt, side="right")
        total = total + jnp.sum(w_arr[idx] * (pt - tt) ** 2)

    if m_rows > 0:
        body_n = m_rows * LANES
        # TODO(synk): for lane-ragged sizes this prefix slice may still copy.
        pred2d = (pred_flat if tail_n == 0 else pred_flat[:body_n]).reshape(m_rows, LANES)
        targ2d = (targ_flat if tail_n == 0 else targ_flat[:body_n]).reshape(m_rows, LANES)

        # Tile geometry: big row tiles to amortize per-step overhead; in-kernel
        # slab-wise accumulation keeps VMEM temporaries bounded.
        if m_rows >= SLAB:
            slab = SLAB
            tm = min(MAX_TM, (m_rows // SLAB) * SLAB)
        elif m_rows >= 8:
            slab = tm = (m_rows // 8) * 8
        else:
            slab = tm = m_rows
        n_tiles = pl.cdiv(m_rows, tm)
        acc_rows = 8 if slab % 8 == 0 else slab

        # Unconditional 2-way split of the tile stream whenever there are >= 2
        # tiles: on v7x this shards the HBM stream across both TensorCores; on
        # v5e/v6e (1 TC) it is just a trivial outer loop.
        n_outer = 2 if n_tiles >= 2 else 1
        n_inner = pl.cdiv(n_tiles, n_outer)
        has_overflow = n_outer * n_inner > n_tiles

        kernel = functools.partial(
            _wmse_kernel, weights=weights, thresholds=thresholds,
            tm=tm, slab=slab, acc_rows=acc_rows, m_rows=m_rows,
            n_tiles=n_tiles, n_inner=n_inner, has_overflow=has_overflow)

        # Clamp so the (possible) overflow step on the second shard re-reads
        # the last tile instead of indexing past the array; the kernel skips
        # its accumulation via pl.when.
        in_map = lambda c, i: (jnp.minimum(c * n_inner + i, n_tiles - 1), 0)

        partials = pl.pallas_call(
            kernel,
            out_shape=jax.ShapeDtypeStruct((n_outer * acc_rows, LANES), jnp.float32),
            grid_spec=pltpu.PrefetchScalarGridSpec(
                num_scalar_prefetch=0,
                grid=(n_outer, n_inner),
                in_specs=[
                    pl.BlockSpec((tm, LANES), in_map),
                    pl.BlockSpec((tm, LANES), in_map),
                ],
                out_specs=pl.BlockSpec((acc_rows, LANES), lambda c, i: (c, 0)),
            ),
            compiler_params=pltpu.CompilerParams(
                dimension_semantics=("parallel", "arbitrary")),
        )(pred2d, targ2d)

        total = total + jnp.sum(partials)

    # Single scalar normalization: mean over the true element count.
    return total / jnp.float32(n_valid)


def _reference(prediction, target, weights, thresholds):
    """Pure-JAX reference mirroring the PyTorch module."""
    w = jnp.asarray(weights, jnp.float32)
    thr = jnp.asarray(thresholds, jnp.float32)
    t = target.astype(jnp.float32)
    p = prediction.astype(jnp.float32)
    bin_index = jnp.searchsorted(thr, t, side="right")
    return jnp.mean(w[bin_index] * (p - t) ** 2)


if __name__ == "__main__":
    # Deterministic "buffer" initialization (module __init__ args).
    weights = (1.0, 2.0, 5.0, 10.0)        # len = len(thresholds) + 1
    thresholds = (0.25, 0.5, 0.75)         # sorted ascending

    key = jax.random.PRNGKey(0)
    shapes = [
        (2, 4, 16, 16),     # tiny: single 16-row tile, single slab
        (3, 5, 40, 40),     # lane-ragged tail + partial last tile + 2 shards
        (8, 8, 64, 128),    # 4096 rows: one 2 MiB tile, 32 unrolled slabs
        (9, 1000, 128),     # 9000 rows: 3 tiles (odd) -> overflow step skipped,
                            # partial last tile, 2-shard split
        (3, 150),           # m_rows < 8 plus ragged tail
        (7,),               # smaller than one lane row: tail-only path
    ]
    for shape in shapes:
        key, k1, k2 = jax.random.split(key, 3)
        prediction = jax.random.uniform(k1, shape, dtype=jnp.float32)
        target = jax.random.uniform(k2, shape, dtype=jnp.float32)

        loss = jax.block_until_ready(
            threshold_wmse(prediction, target, weights, thresholds))
        ref = _reference(prediction, target, weights, thresholds)
        assert jnp.allclose(loss, ref, rtol=1e-4, atol=1e-6), (shape, loss, ref)

    print("KERNEL_OK")
</pallas_src>

<mosaic_0001>
module attributes {stable_mosaic.version = 11 : i64} {
  func.func @_wmse_kernel(%arg0: i32, %arg1: i32, %arg2: memref<16x128xf32, #tpu.memory_space<vmem>>, %arg3: memref<16x128xf32, #tpu.memory_space<vmem>>, %arg4: memref<8x128xf32, #tpu.memory_space<vmem>>) attributes {dimension_semantics = [#tpu.dimension_semantics<parallel>, #tpu.dimension_semantics<arbitrary>], iteration_bounds = array<i64: 1, 1>, scalar_prefetch = 0 : i64, scratch_operands = 0 : i64, tpu.core_type = #tpu.core_type<tc>, window_params = [{transform_indices = @transform_0, window_bounds = array<i64: 16, 128>}, {transform_indices = @transform_1, window_bounds = array<i64: 16, 128>}, {transform_indices = @transform_2, window_bounds = array<i64: 8, 128>}]} {
    %c0_i32 = arith.constant 0 : i32
    %0 = arith.cmpi eq, %arg1, %c0_i32 : i32
    %1 = arith.extui %0 : i1 to i32
    %c0_i32_0 = arith.constant 0 : i32
    %2 = arith.cmpi ne, %1, %c0_i32_0 : i32
    scf.if %2 {
      %cst_15 = arith.constant 0.000000e+00 : f32
      %26 = vector.broadcast %cst_15 : f32 to vector<8x128xf32>
      %c0_16 = arith.constant 0 : index
      %c0_17 = arith.constant 0 : index
      %27 = vector.load %arg4[%c0_16, %c0_17] : memref<8x128xf32, #tpu.memory_space<vmem>>, vector<8x128xf32>
      tpu.vector_store %arg4[%c0_16, %c0_17], %26 {strides = array<i32>} : memref<8x128xf32, #tpu.memory_space<vmem>>, vector<8x128xf32>,
    } else {
    }
    %c0 = arith.constant 0 : index
    %c0_1 = arith.constant 0 : index
    %3 = vector.load %arg3[%c0, %c0_1] : memref<16x128xf32, #tpu.memory_space<vmem>>, vector<16x128xf32>
    %c0_2 = arith.constant 0 : index
    %c0_3 = arith.constant 0 : index
    %4 = vector.load %arg2[%c0_2, %c0_3] : memref<16x128xf32, #tpu.memory_space<vmem>>, vector<16x128xf32>
    %cst = arith.constant 1.000000e+00 : f32
    %5 = vector.broadcast %cst : f32 to vector<16x128xf32>
    %cst_4 = arith.constant 2.500000e-01 : f32
    %6 = vector.broadcast %cst_4 : f32 to vector<16x128xf32>
    %7 = arith.cmpf oge, %3, %6 : vector<16x128xf32>
    %cst_5 = arith.constant 2.000000e+00 : f32
    %8 = vector.broadcast %cst_5 : f32 to vector<16x128xf32>
    %9 = arith.select %7, %8, %5 : vector<16x128xi1>, vector<16x128xf32>
    %cst_6 = arith.constant 5.000000e-01 : f32
    %10 = vector.broadcast %cst_6 : f32 to vector<16x128xf32>
    %11 = arith.cmpf oge, %3, %10 : vector<16x128xf32>
    %cst_7 = arith.constant 5.000000e+00 : f32
    %12 = vector.broadcast %cst_7 : f32 to vector<16x128xf32>
    %13 = arith.select %11, %12, %9 : vector<16x128xi1>, vector<16x128xf32>
    %cst_8 = arith.constant 7.500000e-01 : f32
    %14 = vector.broadcast %cst_8 : f32 to vector<16x128xf32>
    %15 = arith.cmpf oge, %3, %14 : vector<16x128xf32>
    %cst_9 = arith.constant 1.000000e+01 : f32
    %16 = vector.broadcast %cst_9 : f32 to vector<16x128xf32>
    %17 = arith.select %15, %16, %13 : vector<16x128xi1>, vector<16x128xf32>
    %18 = arith.subf %4, %3 : vector<16x128xf32>
    %19 = arith.mulf %17, %18 : vector<16x128xf32>
    %20 = arith.mulf %19, %18 : vector<16x128xf32>
    %21 = vector.shape_cast %20 : vector<16x128xf32> to vector<2x8x128xf32>
    %cst_10 = arith.constant dense<0.000000e+00> : vector<8x128xf32>
    %22 = vector.multi_reduction <add>, %21, %cst_10 [0] : vector<2x8x128xf32> to vector<8x128xf32>
    %c0_11 = arith.constant 0 : index
    %c0_12 = arith.constant 0 : index
    %23 = vector.load %arg4[%c0_11, %c0_12] : memref<8x128xf32, #tpu.memory_space<vmem>>, vector<8x128xf32>
    %24 = arith.addf %23, %22 : vector<8x128xf32>
    %c0_13 = arith.constant 0 : index
    %c0_14 = arith.constant 0 : index
    %25 = vector.load %arg4[%c0_13, %c0_14] : memref<8x128xf32, #tpu.memory_space<vmem>>, vector<8x128xf32>
    tpu.vector_store %arg4[%c0_13, %c0_14], %24 {strides = array<i32>} : memref<8x128xf32, #tpu.memory_space<vmem>>, vector<8x128xf32>,
    return
  }
  func.func @transform_0(%arg0: i32, %arg1: i32) -> (i32, i32) {
    %c1_i32 = arith.constant 1 : i32
    %0 = arith.muli %arg0, %c1_i32 : i32
    %1 = arith.addi %0, %arg1 : i32
    %c0_i32 = arith.constant 0 : i32
    %2 = arith.minsi %1, %c0_i32 : i32
    %c0_i32_0 = arith.constant 0 : i32
    %c0_i32_1 = arith.constant 0 : i32
    return %2, %c0_i32_0 : i32, i32
  }
  func.func @transform_1(%arg0: i32, %arg1: i32) -> (i32, i32) {
    %c1_i32 = arith.constant 1 : i32
    %0 = arith.muli %arg0, %c1_i32 : i32
    %1 = arith.addi %0, %arg1 : i32
    %c0_i32 = arith.constant 0 : i32
    %2 = arith.minsi %1, %c0_i32 : i32
    %c0_i32_0 = arith.constant 0 : i32
    %c0_i32_1 = arith.constant 0 : i32
    return %2, %c0_i32_0 : i32, i32
  }
  func.func @transform_2(%arg0: i32, %arg1: i32) -> (i32, i32) {
    %c0_i32 = arith.constant 0 : i32
    %c0_i32_0 = arith.constant 0 : i32
    return %arg0, %c0_i32 : i32, i32
  }
}

</mosaic_0001>

<llo_original>
// kernel: tpu_custom_call.1
$region0: #{tpu_custom_call.1}
  #allocation0 [shape = 'u32[]', space=smem, size = 0x4, offset = 0x4, fixed_abs, tag = 'smem constant byte address 0x4 - core index']
  #allocation1 [shape = 'u32[72,128]{1,0:T(1,128)}', space=vmem, size = 0x9000, scoped, tag = 'internal scratch']
  %s0 = inlined_call_operand.hbm [shape: f32[16,128], index: 0, kind: input, shape index: {}]
  %s1 = inlined_call_operand.hbm [shape: f32[16,128], index: 1, kind: input, shape index: {}]
  %s2 = inlined_call_operand.hbm [shape: f32[8,128], index: 2, kind: output, shape index: {}]
  %s3 = sld [smem:[#allocation0]]
  $region30: #{tpu_custom_call.1} parent=0
    _
  %s5 = ssub.s32 1, %s3
  %s6 = scalar_select 0, %s5, %s3
  $region1: #{tpu_custom_call.1} parent=0
    #allocation2 [shape = 'u8[8192]{0}', space=vmem, size = 0x2000, scoped, tag = 'input window, operand 0, single buffered']
    #allocation3 [shape = 's32[1]{0}', space=sflag, size = 0x4, scoped, tag = 'scoped memory for tpu_custom_call.1']
    #allocation4 [shape = 's32[1]{0}', space=sflag, size = 0x4, scoped, tag = 'scoped memory for tpu_custom_call.1']
    #allocation5 [shape = 'u8[8192]{0}', space=vmem, size = 0x2000, scoped, tag = 'input window, operand 1, single buffered']
    #allocation6 [shape = 's32[1]{0}', space=sflag, size = 0x4, scoped, tag = 'scoped memory for tpu_custom_call.1']
    #allocation7 [shape = 'u8[4096]{0}', space=vmem, size = 0x1000, scoped, tag = 'output window, operand 0, single buffered']
    %7 = vsyncpa [#allocation3], 0
    %8 = vsyncpa [#allocation6], 0
    %9 = vsyncpa [#allocation4], 0
    // Predicated region
    $region2: #{tpu_custom_call.1} parent=1 // pred_check
      _
    $region3: #{tpu_custom_call.1} parent=1 // pred_check_branch
      %11 = sbr.rel (0) target = $region5
    $region4: #{tpu_custom_call.1} parent=1 // pred_region
      %s12 = sadd.s32 0, 0
      %p13 = scmp.lt.s32.totalorder %s12, 0
      %s14 = scalar_select %p13, %s12, 0
      %s15 = smul.u32 2, %s14
      %17 = vsyncadd [#allocation3], 0
      %s18 = smul.addr %s15, 8
      %s19 = scalar_lea.hbm %s0, %s18
      %s20 = sshll.u32 %s19, 4
      %s21 = int_to_ptr.hbm [resolvable:$true] %s20
      %s22 = sshll.u32 [#allocation2], 4
      %s23 = int_to_ptr.vmem [resolvable:$true] %s22
      %28 = dma.hbm_to_vmem [thread:$0]  %s21, 256, %s23, [#allocation3], 128, 128, 8
    $region5: #{tpu_custom_call.1} parent=1 // pred_fallthru
      _
    // Predicated region
    $region6: #{tpu_custom_call.1} parent=1 // pred_check
      _
    $region7: #{tpu_custom_call.1} parent=1 // pred_check_branch
      %30 = sbr.rel (0) target = $region9
    $region8: #{tpu_custom_call.1} parent=1 // pred_region
      %s31 = sadd.s32 0, 0
      %p32 = scmp.lt.s32.totalorder %s31, 0
      %s33 = scalar_select %p32, %s31, 0
      %s34 = smul.u32 2, %s33
      %36 = vsyncadd [#allocation6], 0
      %s37 = smul.addr %s34, 8
      %s38 = scalar_lea.hbm %s1, %s37
      %s39 = sshll.u32 %s38, 4
      %s40 = int_to_ptr.hbm [resolvable:$true] %s39
      %s41 = sshll.u32 [#allocation5], 4
      %s42 = int_to_ptr.vmem [resolvable:$true] %s41
      %47 = dma.hbm_to_vmem [thread:$0]  %s40, 256, %s42, [#allocation6], 128, 128, 8
    $region9: #{tpu_custom_call.1} parent=1 // pred_fallthru
      _
    // Predicated region
    $region10: #{tpu_custom_call.1} parent=1 // pred_check
      _
    $region11: #{tpu_custom_call.1} parent=1 // pred_check_branch
      %49 = sbr.rel (0) target = $region13
    $region12: #{tpu_custom_call.1} parent=1 // pred_region
      %51 = dma.done [#allocation3], 256
    $region13: #{tpu_custom_call.1} parent=1 // pred_fallthru
      _
    // Predicated region
    $region14: #{tpu_custom_call.1} parent=1 // pred_check
      _
    $region15: #{tpu_custom_call.1} parent=1 // pred_check_branch
      %53 = sbr.rel (0) target = $region17
    $region16: #{tpu_custom_call.1} parent=1 // pred_region
      %55 = dma.done [#allocation6], 256
    $region17: #{tpu_custom_call.1} parent=1 // pred_fallthru
      _
    %s56 = sadd.s32 0, 0
    %p57 = scmp.lt.s32.totalorder %s56, 0
    %s58 = scalar_select %p57, %s56, 0
    %s59 = smul.u32 2, %s58
    %s60 = sadd.s32 0, 0
    %p61 = scmp.lt.s32.totalorder %s60, 0
    %s62 = scalar_select %p61, %s60, 0
    %s63 = smul.u32 2, %s62
    %p64 = scmp.eq.s32.totalorder 0, 0
    // Predicated region
    $region18: #{tpu_custom_call.1} parent=1 // pred_check
      %p65 = pneg %p64
    $region19: #{tpu_custom_call.1} parent=1 // pred_check_branch
      %67 = sbr.rel (%p65) target = $region21
    $region20: #{tpu_custom_call.1} parent=1 // pred_region
      %68 = vst [vmem:[#allocation7] sm:$0xff] 0.0
    $region21: #{tpu_custom_call.1} parent=1 // pred_fallthru
      _
    %v69 = vld [vmem:[#allocation5] sm:$0xff]
    %v70 = vld [vmem:[#allocation5 + $0x8] sm:$0xff]
    %v71 = vld [vmem:[#allocation2] sm:$0xff]
    %v72 = vld [vmem:[#allocation2 + $0x8] sm:$0xff]
    %vm73 = vcmp.ge.f32.partialorder %v69, 0.25
    %vm74 = vcmp.ge.f32.partialorder %v70, 0.25
    %v75 = vsel %vm73, 2.0, 1.0
    %v76 = vsel %vm74, 2.0, 1.0
    %vm77 = vcmp.ge.f32.partialorder %v69, 0.5
    %vm78 = vcmp.ge.f32.partialorder %v70, 0.5
    %v79 = vsel %vm77, 5.0, %v75
    %v80 = vsel %vm78, 5.0, %v76
    %vm81 = vcmp.ge.f32.partialorder %v69, 0.75
    %vm82 = vcmp.ge.f32.partialorder %v70, 0.75
    %v83 = vsel %vm81, 10.0, %v79
    %v84 = vsel %vm82, 10.0, %v80
    %v85 = vsub.f32 %v71, %v69
    %v86 = vsub.f32 %v72, %v70
    %v87 = vmul.f32 %v83, %v85
    %v88 = vmul.f32 %v84, %v86
    %v89 = vmul.f32 %v87, %v85
    %v90 = vmul.f32 %v88, %v86
    %v91 = vadd.f32 %v89, %v90
    %v92 = vld [vmem:[#allocation7] sm:$0xff]
    %v93 = vadd.f32 %v92, %v91
    %94 = vst [vmem:[#allocation7] sm:$0xff] %v93
    // Predicated region
    $region22: #{tpu_custom_call.1} parent=1 // pred_check
      _
    $region23: #{tpu_custom_call.1} parent=1 // pred_check_branch
      %96 = sbr.rel (0) target = $region25
    $region24: #{tpu_custom_call.1} parent=1 // pred_region
      %98 = vsyncadd [#allocation4], 0
      %s100 = sshll.u32 [#allocation7], 4
      %s101 = int_to_ptr.vmem [resolvable:$true] %s100
      %s102 = sshll.u32 %s2, 4
      %s103 = int_to_ptr.hbm [resolvable:$true] %s102
      %105 = dma.vmem_to_hbm [thread:$0]  %s101, 128, %s103, [#allocation4]
    $region25: #{tpu_custom_call.1} parent=1 // pred_fallthru
      _
    // Predicated region
    $region26: #{tpu_custom_call.1} parent=1 // pred_check
      _
    $region27: #{tpu_custom_call.1} parent=1 // pred_check_branch
      %107 = sbr.rel (0) target = $region29
    $region28: #{tpu_custom_call.1} parent=1 // pred_region
      %109 = dma.done [#allocation4], 128
    $region29: #{tpu_custom_call.1} parent=1 // pred_fallthru
      _
    %110 = vsyncpa [#allocation3], 1
    %111 = vsyncpa [#allocation6], 1
    %112 = vsyncpa [#allocation4], 1

</llo_original>
